<compile_context>
chip_gen: v6e
topology: v6e:2x2x1
jax: 0.10.0
libtpu: 0.0.40
codegen_flags: <defaults>
</compile_context>

<pallas_src>
import functools

import jax
import jax.numpy as jnp
from jax.experimental import pallas as pl
from jax.experimental.pallas import tpu as pltpu


def _cdiv(a, b):
    return (a + b - 1) // b


def _round_up(a, b):
    return _cdiv(a, b) * b


def _agu_kernel(params_ref, x_ref, out_ref, *, seq_axis):
    # params_ref: SMEM f32[5] = [w0, w1, w2, conv_bias, threshold] (scalar prefetch)
    # x_ref/out_ref: VMEM f32 blocks; the sequence (length L) lives on `seq_axis`
    # and always spans the full, untiled array dimension.
    w0 = params_ref[0]
    w1 = params_ref[1]
    w2 = params_ref[2]
    b = params_ref[3]
    thr = params_ref[4]

    x = x_ref[...]
    L = x.shape[seq_axis]

    # k=3, padding=1 conv along the sequence axis. Neighbours via XLU roll; the
    # wrapped boundary element is removed by zeroing the *tap* with a tiny
    # (L,1)/(1,L) mask (no full-block iota/select temporaries).
    mshape = (L, 1) if seq_axis == 0 else (1, L)
    idx = jax.lax.broadcasted_iota(jnp.int32, mshape, seq_axis)
    wl = jnp.where(idx == 0, 0.0, w0)        # left tap is 0 at position 0
    wr = jnp.where(idx == L - 1, 0.0, w2)    # right tap is 0 at position L-1

    left = pltpu.roll(x, shift=1, axis=seq_axis)       # x[i-1] (wrap masked by wl)
    right = pltpu.roll(x, shift=L - 1, axis=seq_axis)  # x[i+1] (wrap masked by wr)

    conv = wl * left + w1 * x + wr * right + b
    g = x * jax.nn.sigmoid(conv)             # sigmoid -> EUP slot

    # Adaptive per-row threshold: mean(|g|) over exactly the L real positions.
    t = jnp.sum(jnp.abs(g), axis=seq_axis, keepdims=True) * (thr / L)

    # Reference zeroes where |g| < t (strict). Recompute |g| here rather than
    # keeping it live across the reduction: saves a block-sized VMEM temporary;
    # the extra abs is free VPU slack in a DMA-bound kernel.
    out_ref[...] = g * (jnp.abs(g) >= t).astype(g.dtype)


def _vmem_limit(block_bytes):
    # 2x double-buffered in + out blocks plus compiler temporaries, with slack;
    # explicit so v5e (16 MiB scoped default) and v7x (32 MiB scoped / 64 physical)
    # both get a consistent, known budget.
    return int(min(12 * block_bytes + (8 << 20), 40 << 20))


def _agu_rows(params, x2, N, L, max_block_bytes):
    """Natural (N, L) layout: rows on sublanes, sequence on lanes. 1R + 1W HBM."""
    rows_fit = max(8, (max_block_bytes // (4 * L)) // 8 * 8)
    min_steps = 2 if N >= 16 else 1                      # keep both v7x TCs busy
    steps = max(_cdiv(N, rows_fit), min_steps)
    row_tile = _round_up(_cdiv(N, steps), 8)
    if row_tile >= N:
        row_tile = N                                     # single full-extent block
    grid = _cdiv(N, row_tile)
    block_bytes = row_tile * L * 4

    out = pl.pallas_call(
        functools.partial(_agu_kernel, seq_axis=1),
        out_shape=jax.ShapeDtypeStruct((N, L), jnp.float32),
        grid_spec=pltpu.PrefetchScalarGridSpec(
            num_scalar_prefetch=1,                       # 5 scalars -> SMEM, once
            grid=(grid,),
            in_specs=[pl.BlockSpec((row_tile, L), lambda i, params: (i, 0))],
            out_specs=pl.BlockSpec((row_tile, L), lambda i, params: (i, 0)),
        ),
        compiler_params=pltpu.CompilerParams(
            dimension_semantics=("parallel",),
            vmem_limit_bytes=_vmem_limit(block_bytes),
        ),
    )(params, x2)
    return out


def _agu_cols(params, x2, N, L, max_block_bytes):
    """Small-L fallback: transposed (L, N) slab, rows on the 128-lane axis."""
    xt = x2.T                                            # (L, N): only extra passes
    lanes_fit = max(128, (max_block_bytes // (4 * L)) // 128 * 128)
    n128 = _round_up(N, 128)
    min_steps = 2 if n128 >= 256 else 1                  # keep both v7x TCs busy
    steps = max(_cdiv(n128, lanes_fit), min_steps)
    lane_tile = _round_up(_cdiv(n128, steps), 128)       # bounded pad waste
    if lane_tile >= N:
        lane_tile = N                                    # single full-extent block
    grid = _cdiv(N, lane_tile)
    block_bytes = L * lane_tile * 4

    # Note: input_output_aliases (aliasing the (L, N) slab) was considered but not
    # used; it only saves an HBM allocation, not bandwidth, and this path is the
    # small-L fallback.
    out_t = pl.pallas_call(
        functools.partial(_agu_kernel, seq_axis=0),
        out_shape=jax.ShapeDtypeStruct((L, N), jnp.float32),
        grid_spec=pltpu.PrefetchScalarGridSpec(
            num_scalar_prefetch=1,
            grid=(grid,),
            in_specs=[pl.BlockSpec((L, lane_tile), lambda i, params: (0, i))],
            out_specs=pl.BlockSpec((L, lane_tile), lambda i, params: (0, i)),
        ),
        compiler_params=pltpu.CompilerParams(
            dimension_semantics=("parallel",),
            vmem_limit_bytes=_vmem_limit(block_bytes),
        ),
    )(params, xt)
    return out_t.T


@functools.partial(jax.jit, static_argnames=("max_block_bytes",))
def adaptive_gated_unit(coeffs, conv_w, conv_b, threshold, *, max_block_bytes=2 << 20):
    """coeffs: (B, C, L) float32. Returns gated coeffs, same shape."""
    B, C, L = coeffs.shape
    N = B * C
    x2 = coeffs.reshape(N, L).astype(jnp.float32)        # reshape is a free view

    params = jnp.concatenate(
        [conv_w.reshape(-1).astype(jnp.float32),
         conv_b.reshape(-1).astype(jnp.float32),
         jnp.asarray(threshold, jnp.float32).reshape(-1)]
    )                                                    # f32[5]

    if L >= 128:
        out2 = _agu_rows(params, x2, N, L, max_block_bytes)
    else:
        out2 = _agu_cols(params, x2, N, L, max_block_bytes)
    return out2.reshape(B, C, L)


def _reference(coeffs, conv_w, conv_b, threshold):
    def one(c):
        cp = jnp.pad(c, (1, 1))
        conv = conv_w[0] * cp[:-2] + conv_w[1] * cp[1:-1] + conv_w[2] * cp[2:] + conv_b[0]
        gate = jax.nn.sigmoid(conv)
        g = c * gate
        t = jnp.mean(jnp.abs(g)) * threshold
        return jnp.where(jnp.abs(g) < t, 0.0, g)
    return jax.vmap(jax.vmap(one))(coeffs)


if __name__ == "__main__":
    key = jax.random.PRNGKey(0)
    kx, kw, kb = jax.random.split(key, 3)

    # Deterministic parameter init (Conv1d(1,1,3) weight/bias + threshold=0.1).
    bound = 1.0 / (3.0 ** 0.5)
    conv_w = jax.random.uniform(kw, (3,), jnp.float32, -bound, bound)
    conv_b = jax.random.uniform(kb, (1,), jnp.float32, -bound, bound)
    threshold = jnp.float32(0.1)

    # (B, C, L): small-L transposed fallback; lane-friendly natural layout
    # (single block); and a multi-step natural-layout grid.
    for shape in [(2, 4, 16), (2, 4, 128), (4, 8, 256)]:
        coeffs = jax.random.normal(jax.random.fold_in(kx, shape[-1]), shape,
                                   dtype=jnp.float32)
        out = jax.block_until_ready(
            adaptive_gated_unit(coeffs, conv_w, conv_b, threshold))
        ref = _reference(coeffs, conv_w, conv_b, threshold)
        assert out.shape == shape
        assert jnp.allclose(out, ref, rtol=1e-5, atol=1e-5), shape

    print("KERNEL_OK")
</pallas_src>

<mosaic_0001>
module attributes {stable_mosaic.version = 11 : i64} {
  func.func @_agu_kernel(%arg0: i32, %arg1: memref<5xf32, #tpu.memory_space<smem>>, %arg2: memref<16x8xf32, #tpu.memory_space<vmem>>, %arg3: memref<16x8xf32, #tpu.memory_space<vmem>>) attributes {dimension_semantics = [#tpu.dimension_semantics<parallel>], iteration_bounds = array<i64: 1>, scalar_prefetch = 1 : i64, scratch_operands = 0 : i64, tpu.core_type = #tpu.core_type<tc>, window_params = [{transform_indices = @transform_0, window_bounds = array<i64: 16, 8>}, {transform_indices = @transform_1, window_bounds = array<i64: 16, 8>}]} {
    %c0 = arith.constant 0 : index
    %0 = memref.load %arg1[%c0] : memref<5xf32, #tpu.memory_space<smem>>
    %c1 = arith.constant 1 : index
    %1 = memref.load %arg1[%c1] : memref<5xf32, #tpu.memory_space<smem>>
    %c2 = arith.constant 2 : index
    %2 = memref.load %arg1[%c2] : memref<5xf32, #tpu.memory_space<smem>>
    %c3 = arith.constant 3 : index
    %3 = memref.load %arg1[%c3] : memref<5xf32, #tpu.memory_space<smem>>
    %c4 = arith.constant 4 : index
    %4 = memref.load %arg1[%c4] : memref<5xf32, #tpu.memory_space<smem>>
    %c0_0 = arith.constant 0 : index
    %c0_1 = arith.constant 0 : index
    %5 = vector.load %arg2[%c0_0, %c0_1] : memref<16x8xf32, #tpu.memory_space<vmem>>, vector<16x8xf32>
    %6 = tpu.iota {dimensions = array<i32: 0>} : vector<16x1xi32>
    %c0_i32 = arith.constant 0 : i32
    %7 = vector.broadcast %c0_i32 : i32 to vector<16x1xi32>
    %8 = arith.cmpi eq, %6, %7 : vector<16x1xi32>
    %cst = arith.constant 0.000000e+00 : f32
    %9 = vector.broadcast %cst : f32 to vector<16x1xf32>
    %10 = vector.broadcast %0 : f32 to vector<16x1xf32>
    %11 = arith.select %8, %9, %10 : vector<16x1xi1>, vector<16x1xf32>
    %c15_i32 = arith.constant 15 : i32
    %12 = vector.broadcast %c15_i32 : i32 to vector<16x1xi32>
    %13 = arith.cmpi eq, %6, %12 : vector<16x1xi32>
    %cst_2 = arith.constant 0.000000e+00 : f32
    %14 = vector.broadcast %cst_2 : f32 to vector<16x1xf32>
    %15 = vector.broadcast %2 : f32 to vector<16x1xf32>
    %16 = arith.select %13, %14, %15 : vector<16x1xi1>, vector<16x1xf32>
    %c1_i32 = arith.constant 1 : i32
    %17 = tpu.dynamic_rotate %5 by %c1_i32 dim 0 : vector<16x8xf32>, i32 -> vector<16x8xf32>
    %c15_i32_3 = arith.constant 15 : i32
    %18 = tpu.dynamic_rotate %5 by %c15_i32_3 dim 0 : vector<16x8xf32>, i32 -> vector<16x8xf32>
    %19 = vector.broadcast %11 : vector<16x1xf32> to vector<16x8xf32>
    %20 = arith.mulf %19, %17 : vector<16x8xf32>
    %21 = vector.broadcast %1 : f32 to vector<16x8xf32>
    %22 = arith.mulf %21, %5 : vector<16x8xf32>
    %23 = arith.addf %20, %22 : vector<16x8xf32>
    %24 = vector.broadcast %16 : vector<16x1xf32> to vector<16x8xf32>
    %25 = arith.mulf %24, %18 : vector<16x8xf32>
    %26 = arith.addf %23, %25 : vector<16x8xf32>
    %27 = vector.broadcast %3 : f32 to vector<16x8xf32>
    %28 = arith.addf %26, %27 : vector<16x8xf32>
    %29 = arith.negf %28 : vector<16x8xf32>
    %30 = math.exp %29 : vector<16x8xf32>
    %cst_4 = arith.constant 1.000000e+00 : f32
    %31 = vector.broadcast %cst_4 : f32 to vector<16x8xf32>
    %32 = arith.addf %31, %30 : vector<16x8xf32>
    %33 = arith.divf %31, %32 : vector<16x8xf32>
    %34 = arith.mulf %5, %33 : vector<16x8xf32>
    %35 = math.absf %34 : vector<16x8xf32>
    %cst_5 = arith.constant dense<0.000000e+00> : vector<8xf32>
    %36 = vector.multi_reduction <add>, %35, %cst_5 [0] : vector<16x8xf32> to vector<8xf32>
    %37 = vector.shape_cast %36 : vector<8xf32> to vector<1x8xf32>
    %cst_6 = arith.constant 1.600000e+01 : f32
    %38 = arith.divf %4, %cst_6 : f32
    %39 = vector.broadcast %38 : f32 to vector<1x8xf32>
    %40 = arith.mulf %37, %39 : vector<1x8xf32>
    %41 = math.absf %34 : vector<16x8xf32>
    %42 = vector.broadcast %40 : vector<1x8xf32> to vector<16x8xf32>
    %43 = arith.cmpf oge, %41, %42 : vector<16x8xf32>
    %44 = arith.extui %43 : vector<16x8xi1> to vector<16x8xi32>
    %45 = arith.sitofp %44 : vector<16x8xi32> to vector<16x8xf32>
    %46 = arith.mulf %34, %45 : vector<16x8xf32>
    %c0_7 = arith.constant 0 : index
    %c0_8 = arith.constant 0 : index
    %47 = vector.load %arg3[%c0_7, %c0_8] : memref<16x8xf32, #tpu.memory_space<vmem>>, vector<16x8xf32>
    tpu.vector_store %arg3[%c0_7, %c0_8], %46 {strides = array<i32>} : memref<16x8xf32, #tpu.memory_space<vmem>>, vector<16x8xf32>,
    return
  }
  func.func @transform_0(%arg0: i32, %arg1: memref<5xf32, #tpu.memory_space<smem>>) -> (i32, i32) {
    %c0_i32 = arith.constant 0 : i32
    %c0_i32_0 = arith.constant 0 : i32
    return %c0_i32, %arg0 : i32, i32
  }
  func.func @transform_1(%arg0: i32, %arg1: memref<5xf32, #tpu.memory_space<smem>>) -> (i32, i32) {
    %c0_i32 = arith.constant 0 : i32
    %c0_i32_0 = arith.constant 0 : i32
    return %c0_i32, %arg0 : i32, i32
  }
}

</mosaic_0001>

<llo_original>
// kernel: adaptive_gated_unit.1
$region0: #{adaptive_gated_unit.1}
  #allocation0 [shape = 'u32[]', space=smem, size = 0x4, offset = 0x4, fixed_abs, tag = 'smem constant byte address 0x4 - core index']
  #allocation1 [shape = 'u32[144,128]{1,0:T(1,128)}', space=vmem, size = 0x12000, scoped, tag = 'internal scratch']
  #allocation2 [shape = 's32[1]{0}', space=sflag, size = 0x4, scoped, tag = 'scoped memory for adaptive_gated_unit.1']
  #allocation3 [shape = 'u8[512]{0}', space=smem, size = 0x200, scoped, tag = 'prefetched SMEM operand 0']
  %s0 = inlined_call_operand.vmem [shape: f32[5], index: 0, kind: input, shape index: {}]
  %s1 = inlined_call_operand.vmem [shape: f32[16,8], index: 1, kind: input, shape index: {}]
  %s2 = inlined_call_operand.vmem [shape: f32[16,8], index: 2, kind: output, shape index: {}]
  %s3 = sld [smem:[#allocation0]]
  $region14: #{adaptive_gated_unit.1} parent=0
    _
  %s5 = ssub.s32 1, %s3
  %s6 = scalar_select 0, %s5, %s3
  %s7 = sshll.u32 %s0, 4
  %s8 = int_to_ptr.vmem [resolvable:$true] %s7
  %10 = dma.vmem_to_smem %s8, 16, [#allocation3], [#allocation2]
  %11 = dma.done [#allocation2], 16
  %12 = sfence
  // Predicated region
  $region2: #{adaptive_gated_unit.1} parent=0 // pred_check
    _
  $region3: #{adaptive_gated_unit.1} parent=0 // pred_check_branch
    %14 = sbr.rel (0) target = $region5
  $region4: #{adaptive_gated_unit.1} parent=0 // pred_region
    _
  $region5: #{adaptive_gated_unit.1} parent=0 // pred_fallthru
    _
  %s15 = sld [smem:[#allocation3]]
  %s16 = sld [smem:[#allocation3 + $0x1]]
  %s17 = sld [smem:[#allocation3 + $0x2]]
  %s18 = sld [smem:[#allocation3 + $0x3]]
  %s19 = sld [smem:[#allocation3 + $0x4]]
  %v20 = vld [vmem:[%s1] sm:$0xff]
  %v21 = vld [vmem:[%s1 + $0x8] sm:$0xff]
  %v22 = vlaneseq
  %v23 = vshrl.u32 %v22, 7
  %v24 = vadd.s32 %v23, 8
  %vm25 = vcmp.eq.s32.totalorder %v23, 0
  %vm26 = vcmp.eq.s32.totalorder %v24, 0
  %v27 = vstv %s15
  %v28 = vsel %vm25, 0.0, %v27
  %v29 = vsel %vm26, 0.0, %v27
  %vm30 = vcmp.eq.s32.totalorder %v23, 15
  %vm31 = vcmp.eq.s32.totalorder %v24, 15
  %v32 = vstv %s17
  %v33 = vsel %vm30, 0.0, %v32
  %v34 = vsel %vm31, 0.0, %v32
  %v35 = vrot.slane %v20, 7
  %v36 = vrot.slane %v21, 7
  %vm37 = vcmp.lt.s32.totalorder %v23, 1
  %v38 = vsel %vm37, %v35, %v36
  %v39 = vsel %vm37, %v36, %v35
  %v40 = vrot.slane %v20, 1
  %v41 = vrot.slane %v21, 1
  %vm42 = vcmp.lt.s32.totalorder %v23, 7
  %v43 = vsel %vm42, %v40, %v41
  %v44 = vsel %vm42, %v41, %v40
  %v45 = vmul.f32 %v28, %v39
  %v46 = vmul.f32 %v29, %v38
  %v47 = vstv %s16
  %v48 = vmul.f32 %v47, %v20
  %v49 = vmul.f32 %v47, %v21
  %v50 = vadd.f32 %v45, %v48
  %v51 = vadd.f32 %v46, %v49
  %v52 = vmul.f32 %v33, %v43
  %v53 = vmul.f32 %v34, %v44
  %v54 = vadd.f32 %v50, %v52
  %v55 = vadd.f32 %v51, %v53
  %v56 = vstv %s18
  %v57 = vadd.f32 %v54, %v56
  %v58 = vadd.f32 %v55, %v56
  %v59 = vxor.u32 %v57, 2147483648
  %v60 = vxor.u32 %v58, 2147483648
  %v61 = vmul.f32 %v59, 1.442695
  %v62 = vpow.pop %v61
  %v63 = vmul.f32 %v60, 1.442695
  %v64 = vpow.pop %v63
  %v65 = vadd.f32 %v62, 1.0
  %v66 = vadd.f32 %v64, 1.0
  %v67 = vrcp.pop %v65
  %v68 = vmul.f32 1.0, %v67
  %v69 = vrcp.pop %v66
  %v70 = vmul.f32 1.0, %v69
  %v71 = vmul.f32 %v20, %v68
  %v72 = vmul.f32 %v21, %v70
  %v73 = vand.u32 2147483647, %v71
  %v74 = vand.u32 2147483647, %v72
  %vm75 = vcmask 64512
  %v76 = vsel %vm75, %v73, 0.0
  %v77 = vsel %vm75, %v74, 0.0
  %v78 = vadd.f32 %v76, %v77
  %v79 = vrot.slane %v78, 4
  %v80 = vadd.f32 %v78, %v79
  %v81 = vrot.slane %v80, 2
  %v82 = vadd.f32 %v80, %v81
  %v83 = vrot.slane %v82, 1
  %v84 = vadd.f32 %v82, %v83
  %v85 = vrcp.pop 16.0
  %s86 = vtos %v85
  %s87 = smul.f32 %s19, %s86
  %v88 = vstv %s87
  %v89 = vmul.f32 %v84, %v88
  %vm90 = vcmp.ge.f32.partialorder %v73, %v89
  %vm91 = vcmp.ge.f32.partialorder %v74, %v89
  %v92 = vsel %vm90, 1, 0
  %v93 = vsel %vm91, 1, 0
  %v94 = vcvt.s32.f32 %v92
  %v95 = vcvt.s32.f32 %v93
  %v96 = vmul.f32 %v71, %v94
  %v97 = vmul.f32 %v72, %v95
  %98 = vst.msk [vmem:[%s2] sm:$0xff] %vm75, %v96
  %99 = vst.msk [vmem:[%s2 + $0x8] sm:$0xff] %vm75, %v97
  // Predicated region
  $region6: #{adaptive_gated_unit.1} parent=0 // pred_check
    _
  $region7: #{adaptive_gated_unit.1} parent=0 // pred_check_branch
    %101 = sbr.rel (0) target = $region9
  $region8: #{adaptive_gated_unit.1} parent=0 // pred_region
    _
  $region9: #{adaptive_gated_unit.1} parent=0 // pred_fallthru
    _
  // Predicated region
  $region10: #{adaptive_gated_unit.1} parent=0 // pred_check
    _
  $region11: #{adaptive_gated_unit.1} parent=0 // pred_check_branch
    %103 = sbr.rel (0) target = $region13
  $region12: #{adaptive_gated_unit.1} parent=0 // pred_region
    _
  $region13: #{adaptive_gated_unit.1} parent=0 // pred_fallthru
    _

</llo_original>
